<compile_context>
chip_gen: v6e
topology: v6e:2x2x1
jax: 0.10.0
libtpu: 0.0.40
codegen_flags: <defaults>
</compile_context>

<pallas_src>
import numpy as np
import jax
import jax.numpy as jnp
from jax import lax
from jax.experimental import pallas as pl
from jax.experimental.pallas import tpu as pltpu

_LANES = 128
_SUBL = 8
_CHUNK_ROWS = 2048                      # rows per in-kernel chunk (bounds f32 temporaries)
_TARGET_TILE_BYTES = 8 * 1024 * 1024    # per input, per pipeline buffer
_VMEM_LIMIT_BYTES = 48 * 1024 * 1024    # <= v7x 64 MiB physical; plenty on v5e/v6e
_NUM_CORES = 2                          # v7x megacore; extra axis is harmless on 1-TC chips


def _round_up(x: int, m: int) -> int:
    return -(-x // m) * m


def _make_kernel(tile_rows: int, chunk_rows: int, inner_tiles: int,
                 rows_valid: int, full_blocks: int, need_mask: bool):
    n_chunks = tile_rows // chunk_rows
    groups = chunk_rows // _SUBL

    def accum(xr_ref, xi_ref, o_ref, gb, masked):
        # Static Python loop over chunks keeps per-chunk temporaries small.
        for j in range(n_chunks):
            r0 = j * chunk_rows
            xr = xr_ref[pl.ds(r0, chunk_rows), :].astype(jnp.float32)
            xi = xi_ref[pl.ds(r0, chunk_rows), :].astype(jnp.float32)
            d = jnp.abs(xr - xi)
            if masked:
                row = (lax.broadcasted_iota(jnp.int32, (chunk_rows, _LANES), 0)
                       + gb * tile_rows + r0)
                d = jnp.where(row < rows_valid, d, 0.0)
            # Sublane-preserving partial reduction: VPU adds only, no cross-lane XLU.
            o_ref[...] += d.reshape(groups, _SUBL, _LANES).sum(axis=0)

    def kernel(xr_ref, xi_ref, o_ref):
        c = pl.program_id(0)          # core / partial-sum axis ("parallel")
        i = pl.program_id(1)          # streaming reduction axis ("arbitrary")
        gb = c * inner_tiles + i      # logical global block index

        @pl.when(i == 0)
        def _init():
            o_ref[...] = jnp.zeros_like(o_ref)

        if need_mask:
            @pl.when(gb < full_blocks)
            def _fast():
                accum(xr_ref, xi_ref, o_ref, gb, masked=False)

            @pl.when(gb >= full_blocks)
            def _tail():
                accum(xr_ref, xi_ref, o_ref, gb, masked=True)
        else:
            accum(xr_ref, xi_ref, o_ref, gb, masked=False)

    return kernel


def _l1_sum_pallas(xr2, xi2, rows: int):
    """Sum of |xr2 - xi2| over a (rows, 128) lane-dense view (f32 accumulation)."""
    itemsize = np.dtype(xr2.dtype).itemsize
    target_rows = max(_CHUNK_ROWS, _TARGET_TILE_BYTES // (_LANES * itemsize))

    rows_pad = _round_up(rows, _SUBL)
    if rows_pad <= _CHUNK_ROWS:
        tile_rows = rows_pad
        chunk_rows = rows_pad
    else:
        tile_rows = min(_round_up(target_rows, _CHUNK_ROWS),
                        _round_up(rows_pad, _CHUNK_ROWS))
        chunk_rows = _CHUNK_ROWS

    row_blocks = -(-rows // tile_rows)
    nc = _NUM_CORES if row_blocks >= _NUM_CORES else 1
    inner = -(-row_blocks // nc)
    covered_rows = nc * inner * tile_rows
    need_mask = covered_rows > rows
    full_blocks = rows // tile_rows
    clamp = nc * inner > row_blocks
    max_blk = row_blocks - 1

    if clamp:
        # Clamp logically-OOB block indices (they are fully masked in-kernel),
        # so no out-of-bounds DMA is ever generated.
        in_idx = lambda c, i: (jnp.minimum(c * inner + i, max_blk), 0)
    else:
        in_idx = lambda c, i: (c * inner + i, 0)

    kernel = _make_kernel(tile_rows, chunk_rows, inner, rows, full_blocks, need_mask)

    parts = pl.pallas_call(
        kernel,
        out_shape=jax.ShapeDtypeStruct((nc * _SUBL, _LANES), jnp.float32),
        grid=(nc, inner),
        in_specs=[
            pl.BlockSpec((tile_rows, _LANES), in_idx),   # x_rec tile
            pl.BlockSpec((tile_rows, _LANES), in_idx),   # x_in  tile
        ],
        # Per-core lane-dense partial-sum block; resident across the inner axis.
        out_specs=pl.BlockSpec((_SUBL, _LANES), lambda c, i: (c, 0)),
        compiler_params=pltpu.CompilerParams(
            dimension_semantics=("parallel", "arbitrary"),
            vmem_limit_bytes=_VMEM_LIMIT_BYTES,
        ),
    )(xr2, xi2)
    return jnp.sum(parts)


def vae_l1_loss(x_reconstructed, x_input, mu, lnvar, alpha: float = 0.1):
    assert x_reconstructed.shape == x_input.shape, "shape mismatch"
    count = int(np.prod(x_reconstructed.shape))

    flat_r = x_reconstructed.reshape(-1)
    flat_i = x_input.reshape(-1)

    rem = count % _LANES
    main = count - rem
    rows = main // _LANES

    l1_sum = jnp.float32(0.0)
    if rows > 0:
        if rem == 0:
            # Free reshape (no pad, no copy): lane-dense (rows, 128) view.
            xr2 = flat_r.reshape(rows, _LANES)
            xi2 = flat_i.reshape(rows, _LANES)
        else:
            # Ragged element count: kernel handles the 128-aligned prefix; the
            # (<128 element) tail is reduced in plain JAX below.
            xr2 = flat_r[:main].reshape(rows, _LANES)
            xi2 = flat_i[:main].reshape(rows, _LANES)
        l1_sum = _l1_sum_pallas(xr2, xi2, rows)
    if rem:
        l1_sum = l1_sum + jnp.sum(
            jnp.abs(flat_r[main:].astype(jnp.float32)
                    - flat_i[main:].astype(jnp.float32)))

    rec = l1_sum / jnp.float32(count)
    # KL term on tiny mu/lnvar stays in plain JAX (keeps the kernel a pure
    # streaming L1 reduction and frees VMEM for bigger tiles).
    kl = -0.5 * jnp.mean(1.0 + lnvar - mu * mu - jnp.exp(lnvar))
    return rec + jnp.float32(alpha) * kl


def _reference(x_rec, x_in, mu, lnvar, alpha=0.1):
    rec = jnp.mean(jnp.abs(x_rec.astype(jnp.float32) - x_in.astype(jnp.float32)))
    kl = -0.5 * jnp.mean(1.0 + lnvar - mu * mu - jnp.exp(lnvar))
    return rec + alpha * kl


if __name__ == "__main__":
    key = jax.random.PRNGKey(0)
    k1, k2, k3, k4 = jax.random.split(key, 4)

    N, C, H, W = 2, 4, 16, 16
    LATENT = 32
    ALPHA = 0.1

    x_rec = jax.random.uniform(k1, (N, C, H, W), dtype=jnp.float32)
    x_in = jax.random.uniform(k2, (N, C, H, W), dtype=jnp.float32)
    mu = jax.random.normal(k3, (N, LATENT), dtype=jnp.float32)
    lnvar = 0.1 * jax.random.normal(k4, (N, LATENT), dtype=jnp.float32)

    loss = vae_l1_loss(x_rec, x_in, mu, lnvar, alpha=ALPHA)
    loss = jax.block_until_ready(loss)

    ref = _reference(x_rec, x_in, mu, lnvar, alpha=ALPHA)
    np.testing.assert_allclose(np.asarray(loss), np.asarray(ref),
                               rtol=1e-5, atol=1e-6)

    print("KERNEL_OK")
</pallas_src>

<mosaic_0001>
module attributes {stable_mosaic.version = 11 : i64} {
  func.func @kernel(%arg0: i32, %arg1: i32, %arg2: memref<16x128xf32, #tpu.memory_space<vmem>>, %arg3: memref<16x128xf32, #tpu.memory_space<vmem>>, %arg4: memref<8x128xf32, #tpu.memory_space<vmem>>) attributes {dimension_semantics = [#tpu.dimension_semantics<parallel>, #tpu.dimension_semantics<arbitrary>], iteration_bounds = array<i64: 1, 1>, scalar_prefetch = 0 : i64, scratch_operands = 0 : i64, tpu.core_type = #tpu.core_type<tc>, window_params = [{transform_indices = @transform_0, window_bounds = array<i64: 16, 128>}, {transform_indices = @transform_1, window_bounds = array<i64: 16, 128>}, {transform_indices = @transform_2, window_bounds = array<i64: 8, 128>}]} {
    %c0_i32 = arith.constant 0 : i32
    %0 = arith.cmpi eq, %arg1, %c0_i32 : i32
    %1 = arith.extui %0 : i1 to i32
    %c0_i32_0 = arith.constant 0 : i32
    %2 = arith.cmpi ne, %1, %c0_i32_0 : i32
    scf.if %2 {
      %cst_8 = arith.constant 0.000000e+00 : f32
      %12 = vector.broadcast %cst_8 : f32 to vector<8x128xf32>
      %c0_9 = arith.constant 0 : index
      %c0_10 = arith.constant 0 : index
      %13 = vector.load %arg4[%c0_9, %c0_10] : memref<8x128xf32, #tpu.memory_space<vmem>>, vector<8x128xf32>
      tpu.vector_store %arg4[%c0_9, %c0_10], %12 {strides = array<i32>} : memref<8x128xf32, #tpu.memory_space<vmem>>, vector<8x128xf32>,
    } else {
    }
    %c0 = arith.constant 0 : index
    %c0_1 = arith.constant 0 : index
    %3 = vector.load %arg2[%c0, %c0_1] : memref<16x128xf32, #tpu.memory_space<vmem>>, vector<16x128xf32>
    %c0_2 = arith.constant 0 : index
    %c0_3 = arith.constant 0 : index
    %4 = vector.load %arg3[%c0_2, %c0_3] : memref<16x128xf32, #tpu.memory_space<vmem>>, vector<16x128xf32>
    %5 = arith.subf %3, %4 : vector<16x128xf32>
    %6 = math.absf %5 : vector<16x128xf32>
    %c0_4 = arith.constant 0 : index
    %c0_5 = arith.constant 0 : index
    %7 = vector.load %arg4[%c0_4, %c0_5] : memref<8x128xf32, #tpu.memory_space<vmem>>, vector<8x128xf32>
    %8 = vector.shape_cast %6 : vector<16x128xf32> to vector<2x8x128xf32>
    %cst = arith.constant dense<0.000000e+00> : vector<8x128xf32>
    %9 = vector.multi_reduction <add>, %8, %cst [0] : vector<2x8x128xf32> to vector<8x128xf32>
    %10 = arith.addf %7, %9 : vector<8x128xf32>
    %c0_6 = arith.constant 0 : index
    %c0_7 = arith.constant 0 : index
    %11 = vector.load %arg4[%c0_6, %c0_7] : memref<8x128xf32, #tpu.memory_space<vmem>>, vector<8x128xf32>
    tpu.vector_store %arg4[%c0_6, %c0_7], %10 {strides = array<i32>} : memref<8x128xf32, #tpu.memory_space<vmem>>, vector<8x128xf32>,
    return
  }
  func.func @transform_0(%arg0: i32, %arg1: i32) -> (i32, i32) {
    %c1_i32 = arith.constant 1 : i32
    %0 = arith.muli %arg0, %c1_i32 : i32
    %1 = arith.addi %0, %arg1 : i32
    %c0_i32 = arith.constant 0 : i32
    %c0_i32_0 = arith.constant 0 : i32
    return %1, %c0_i32 : i32, i32
  }
  func.func @transform_1(%arg0: i32, %arg1: i32) -> (i32, i32) {
    %c1_i32 = arith.constant 1 : i32
    %0 = arith.muli %arg0, %c1_i32 : i32
    %1 = arith.addi %0, %arg1 : i32
    %c0_i32 = arith.constant 0 : i32
    %c0_i32_0 = arith.constant 0 : i32
    return %1, %c0_i32 : i32, i32
  }
  func.func @transform_2(%arg0: i32, %arg1: i32) -> (i32, i32) {
    %c0_i32 = arith.constant 0 : i32
    %c0_i32_0 = arith.constant 0 : i32
    return %arg0, %c0_i32 : i32, i32
  }
}

</mosaic_0001>

<llo_original>
// kernel: tpu_custom_call.1
$region0: #{tpu_custom_call.1}
  #allocation0 [shape = 'u32[]', space=smem, size = 0x4, offset = 0x4, fixed_abs, tag = 'smem constant byte address 0x4 - core index']
  #allocation1 [shape = 'u32[144,128]{1,0:T(1,128)}', space=vmem, size = 0x12000, scoped, tag = 'internal scratch']
  %s0 = inlined_call_operand.hbm [shape: f32[16,128], index: 0, kind: input, shape index: {}]
  %s1 = inlined_call_operand.hbm [shape: f32[16,128], index: 1, kind: input, shape index: {}]
  %s2 = inlined_call_operand.hbm [shape: f32[8,128], index: 2, kind: output, shape index: {}]
  %s3 = sld [smem:[#allocation0]]
  $region30: #{tpu_custom_call.1} parent=0
    _
  %s5 = ssub.s32 1, %s3
  %s6 = scalar_select 0, %s5, %s3
  $region1: #{tpu_custom_call.1} parent=0
    #allocation2 [shape = 'u8[8192]{0}', space=vmem, size = 0x2000, scoped, tag = 'input window, operand 0, single buffered']
    #allocation3 [shape = 's32[1]{0}', space=sflag, size = 0x4, scoped, tag = 'scoped memory for tpu_custom_call.1']
    #allocation4 [shape = 's32[1]{0}', space=sflag, size = 0x4, scoped, tag = 'scoped memory for tpu_custom_call.1']
    #allocation5 [shape = 'u8[8192]{0}', space=vmem, size = 0x2000, scoped, tag = 'input window, operand 1, single buffered']
    #allocation6 [shape = 's32[1]{0}', space=sflag, size = 0x4, scoped, tag = 'scoped memory for tpu_custom_call.1']
    #allocation7 [shape = 'u8[4096]{0}', space=vmem, size = 0x1000, scoped, tag = 'output window, operand 0, single buffered']
    %7 = vsyncpa [#allocation3], 0
    %8 = vsyncpa [#allocation6], 0
    %9 = vsyncpa [#allocation4], 0
    // Predicated region
    $region2: #{tpu_custom_call.1} parent=1 // pred_check
      _
    $region3: #{tpu_custom_call.1} parent=1 // pred_check_branch
      %11 = sbr.rel (0) target = $region5
    $region4: #{tpu_custom_call.1} parent=1 // pred_region
      %s12 = sadd.s32 0, 0
      %s13 = smul.u32 2, %s12
      %s15 = ssub.s32 256, 256
      %16 = vsyncadd [#allocation3], %s15
      %s17 = smul.addr %s13, 128
      %s18 = scalar_lea.hbm %s0, %s17
      %s19 = sshll.u32 [#allocation2], 4
      %s20 = int_to_ptr.vmem [resolvable:$true] %s19
      %25 = dma.hbm_to_vmem [thread:$0]  %s18, 256, %s20, [#allocation3], 128, 128, 8
    $region5: #{tpu_custom_call.1} parent=1 // pred_fallthru
      _
    // Predicated region
    $region6: #{tpu_custom_call.1} parent=1 // pred_check
      _
    $region7: #{tpu_custom_call.1} parent=1 // pred_check_branch
      %27 = sbr.rel (0) target = $region9
    $region8: #{tpu_custom_call.1} parent=1 // pred_region
      %s28 = sadd.s32 0, 0
      %s29 = smul.u32 2, %s28
      %s31 = ssub.s32 256, 256
      %32 = vsyncadd [#allocation6], %s31
      %s33 = smul.addr %s29, 128
      %s34 = scalar_lea.hbm %s1, %s33
      %s35 = sshll.u32 [#allocation5], 4
      %s36 = int_to_ptr.vmem [resolvable:$true] %s35
      %41 = dma.hbm_to_vmem [thread:$0]  %s34, 256, %s36, [#allocation6], 128, 128, 8
    $region9: #{tpu_custom_call.1} parent=1 // pred_fallthru
      _
    // Predicated region
    $region10: #{tpu_custom_call.1} parent=1 // pred_check
      _
    $region11: #{tpu_custom_call.1} parent=1 // pred_check_branch
      %43 = sbr.rel (0) target = $region13
    $region12: #{tpu_custom_call.1} parent=1 // pred_region
      %44 = dma.done [#allocation3], 256
    $region13: #{tpu_custom_call.1} parent=1 // pred_fallthru
      _
    // Predicated region
    $region14: #{tpu_custom_call.1} parent=1 // pred_check
      _
    $region15: #{tpu_custom_call.1} parent=1 // pred_check_branch
      %46 = sbr.rel (0) target = $region17
    $region16: #{tpu_custom_call.1} parent=1 // pred_region
      %47 = dma.done [#allocation6], 256
    $region17: #{tpu_custom_call.1} parent=1 // pred_fallthru
      _
    %s48 = sadd.s32 0, 0
    %s49 = smul.u32 2, %s48
    %s50 = sadd.s32 0, 0
    %s51 = smul.u32 2, %s50
    %p52 = scmp.eq.s32.totalorder 0, 0
    // Predicated region
    $region18: #{tpu_custom_call.1} parent=1 // pred_check
      %p53 = pneg %p52
    $region19: #{tpu_custom_call.1} parent=1 // pred_check_branch
      %55 = sbr.rel (%p53) target = $region21
    $region20: #{tpu_custom_call.1} parent=1 // pred_region
      %56 = vst [vmem:[#allocation7] sm:$0xff] 0.0
    $region21: #{tpu_custom_call.1} parent=1 // pred_fallthru
      _
    %v57 = vld [vmem:[#allocation2] sm:$0xff]
    %v58 = vld [vmem:[#allocation2 + $0x8] sm:$0xff]
    %v59 = vld [vmem:[#allocation5] sm:$0xff]
    %v60 = vld [vmem:[#allocation5 + $0x8] sm:$0xff]
    %v61 = vsub.f32 %v57, %v59
    %v62 = vsub.f32 %v58, %v60
    %v63 = vand.u32 2147483647, %v61
    %v64 = vand.u32 2147483647, %v62
    %v65 = vld [vmem:[#allocation7] sm:$0xff]
    %v66 = vadd.f32 %v63, %v64
    %v67 = vadd.f32 %v65, %v66
    %68 = vst [vmem:[#allocation7] sm:$0xff] %v67
    // Predicated region
    $region22: #{tpu_custom_call.1} parent=1 // pred_check
      _
    $region23: #{tpu_custom_call.1} parent=1 // pred_check_branch
      %70 = sbr.rel (0) target = $region25
    $region24: #{tpu_custom_call.1} parent=1 // pred_region
      %s72 = ssub.s32 128, 128
      %73 = vsyncadd [#allocation4], %s72
      %s75 = sshll.u32 [#allocation7], 4
      %s76 = int_to_ptr.vmem [resolvable:$true] %s75
      %78 = dma.vmem_to_hbm [thread:$0]  %s76, 128, %s2, [#allocation4]
    $region25: #{tpu_custom_call.1} parent=1 // pred_fallthru
      _
    // Predicated region
    $region26: #{tpu_custom_call.1} parent=1 // pred_check
      _
    $region27: #{tpu_custom_call.1} parent=1 // pred_check_branch
      %80 = sbr.rel (0) target = $region29
    $region28: #{tpu_custom_call.1} parent=1 // pred_region
      %81 = dma.done [#allocation4], 128
    $region29: #{tpu_custom_call.1} parent=1 // pred_fallthru
      _
    %82 = vsyncpa [#allocation3], 1
    %83 = vsyncpa [#allocation6], 1
    %84 = vsyncpa [#allocation4], 1

</llo_original>
